<compile_context>
chip_gen: v7x
topology: tpu7x:2x2x1
jax: 0.10.0
libtpu: 0.0.40
codegen_flags: <defaults>
</compile_context>

<pallas_src>
import jax
import jax.numpy as jnp
from jax.experimental import pallas as pl
from jax.experimental.pallas import tpu as pltpu


def _binarize_kernel(thr_ref, x_ref, o_ref):
    x = x_ref[...]
    one = jnp.ones((), dtype=x.dtype)            # constants in x's dtype -> packed select/store
    o_ref[...] = jnp.where(x > thr_ref[0, 0], one, -one)


def _round_up(v, m):
    return ((v + m - 1) // m) * m


def _choose_block_rows(rows, lanes, itemsize, target_bytes=4 * 1024 * 1024):
    """Row tile: ~4 MiB blocks, aligned to the packed sublane tile, at least 2
    blocks for arrays > 1 MiB (v7x megacore). Need not divide `rows`."""
    mult = max(8, 32 // itemsize)                 # 8 f32, 16 bf16, 32 int8/fp8
    row_bytes = lanes * itemsize
    target = max(mult, (target_bytes // row_bytes) // mult * mult)
    if rows * row_bytes > (1 << 20):              # ensure >= 2 row blocks (both v7x TCs stream)
        target = min(target, _round_up(pl.cdiv(rows, 2), mult))
    if rows <= target:
        return rows                               # single block; block == full dim always legal
    return target


def _run(x2d, thr, block_rows):
    rows, lanes = x2d.shape
    itemsize = jnp.dtype(x2d.dtype).itemsize
    return pl.pallas_call(
        _binarize_kernel,
        out_shape=jax.ShapeDtypeStruct((rows, lanes), x2d.dtype),
        grid=(pl.cdiv(rows, block_rows),),
        in_specs=[
            pl.BlockSpec(memory_space=pltpu.MemorySpace.SMEM),      # threshold scalar
            pl.BlockSpec((block_rows, lanes), lambda i: (i, 0)),
        ],
        out_specs=pl.BlockSpec((block_rows, lanes), lambda i: (i, 0)),
        compiler_params=pltpu.CompilerParams(
            dimension_semantics=("parallel",),
            vmem_limit_bytes=32 * 1024 * 1024,
        ),
        cost_estimate=pl.CostEstimate(
            flops=rows * lanes,
            transcendentals=0,
            bytes_accessed=2 * rows * lanes * itemsize,
        ),
    )(thr, x2d)


def _binarize_contiguous(flat, thr):
    """flat.size must be divisible by 128; metadata-only reshape to (rows, lanes)."""
    n = flat.size
    itemsize = jnp.dtype(flat.dtype).itemsize
    lanes = next(l for l in (1024, 512, 256, 128) if n % l == 0)
    rows = n // lanes
    block_rows = _choose_block_rows(rows, lanes, itemsize)
    out2d = _run(flat.reshape(rows, lanes), thr, block_rows)
    return out2d.reshape(-1)


def _jnp_binarize(x, threshold):
    one = jnp.asarray(1.0, x.dtype)
    return jnp.where(x > threshold, one, -one)


def binary_activation(x, threshold: float = 0.0):
    """Forward of BinaryActivation: where(x > threshold, 1.0, -1.0), same shape/dtype.

    Matches the PyTorch code's strict `x > threshold` (x == threshold -> -1).
    # TODO(synk): training-mode STE backward (grad zeroed where |x| > 1) needs a
    # jax.custom_vjp around this forward; only forward/eval semantics implemented.
    """
    orig_shape = x.shape
    n = x.size
    if n == 0:
        return x
    thr = jnp.asarray(threshold, dtype=jnp.float32).reshape(1, 1)
    flat = x.reshape(-1)
    n128 = (n // 128) * 128

    if n128 == 0:
        # fewer than 128 elements: not worth a kernel launch
        return _jnp_binarize(x, threshold)
    if n128 == n:
        return _binarize_contiguous(flat, thr).reshape(orig_shape)

    # ragged tail (< 128 elements): kernel on the prefix, plain jnp on the tail
    head = _binarize_contiguous(flat[:n128], thr)
    tail = _jnp_binarize(flat[n128:], threshold)
    return jnp.concatenate([head, tail]).reshape(orig_shape)


if __name__ == "__main__":
    k1, k2, k3, k4, k5 = jax.random.split(jax.random.PRNGKey(0), 5)

    def _ref(x, threshold=0.0):
        one = jnp.asarray(1.0, x.dtype)
        return jnp.where(x > threshold, one, -one)

    # 1) NCHW conv activation like in the BNN (single-block path)
    x1 = jax.random.normal(k1, (2, 4, 16, 16), dtype=jnp.float32)
    o1 = jax.block_until_ready(binary_activation(x1))
    assert o1.shape == x1.shape and o1.dtype == x1.dtype
    assert bool(jnp.all(o1 == _ref(x1)))

    # 2) larger activation: multi-block pipelined grid (>= 2 blocks, megacore split)
    x2 = jax.random.normal(k2, (2, 32, 128, 128), dtype=jnp.float32)
    o2 = jax.block_until_ready(binary_activation(x2))
    assert o2.shape == x2.shape and o2.dtype == x2.dtype
    assert bool(jnp.all(o2 == _ref(x2)))

    # 3) bf16 with a masked partial last row-block (rows=1000, block_rows=512)
    x3 = jax.random.normal(k3, (1000, 32, 32), dtype=jnp.bfloat16)
    o3 = jax.block_until_ready(binary_activation(x3))
    assert o3.shape == x3.shape and o3.dtype == x3.dtype
    assert bool(jnp.all(o3 == _ref(x3)))

    # 4) ragged element count (n % 128 != 0): kernel prefix + jnp tail
    x4 = jax.random.normal(k4, (3, 5, 11), dtype=jnp.bfloat16)
    o4 = jax.block_until_ready(binary_activation(x4))
    assert o4.shape == x4.shape and o4.dtype == x4.dtype
    assert bool(jnp.all(o4 == _ref(x4)))

    # 5) tiny tensor (< 128 elements) and a nonzero threshold
    x5 = jax.random.normal(k5, (4, 7), dtype=jnp.float32)
    o5 = jax.block_until_ready(binary_activation(x5, threshold=0.25))
    assert o5.shape == x5.shape and o5.dtype == x5.dtype
    assert bool(jnp.all(o5 == _ref(x5, 0.25)))

    print("KERNEL_OK")
</pallas_src>

<mosaic_0001>
module attributes {stable_mosaic.version = 11 : i64} {
  func.func @_binarize_kernel(%arg0: i32, %arg1: memref<1x1xf32, #tpu.memory_space<smem>>, %arg2: memref<2x1024xf32, #tpu.memory_space<vmem>>, %arg3: memref<2x1024xf32, #tpu.memory_space<vmem>>) attributes {dimension_semantics = [#tpu.dimension_semantics<parallel>], iteration_bounds = array<i64: 1>, scalar_prefetch = 0 : i64, scratch_operands = 0 : i64, tpu.core_type = #tpu.core_type<tc>, window_params = [{transform_indices = @transform_0, window_bounds = array<i64: 1, 1>}, {transform_indices = @transform_1, window_bounds = array<i64: 2, 1024>}, {transform_indices = @transform_2, window_bounds = array<i64: 2, 1024>}]} {
    %c0 = arith.constant 0 : index
    %c0_0 = arith.constant 0 : index
    %0 = vector.load %arg2[%c0, %c0_0] : memref<2x1024xf32, #tpu.memory_space<vmem>>, vector<2x1024xf32>
    %c0_1 = arith.constant 0 : index
    %c0_2 = arith.constant 0 : index
    %1 = memref.load %arg1[%c0_1, %c0_2] : memref<1x1xf32, #tpu.memory_space<smem>>
    %2 = vector.broadcast %1 : f32 to vector<2x1024xf32>
    %3 = arith.cmpf ogt, %0, %2 : vector<2x1024xf32>
    %cst = arith.constant 0.000000e+00 : f32
    %cst_3 = arith.constant 1.000000e+00 : f32
    %4 = arith.subf %cst, %cst_3 : f32
    %cst_4 = arith.constant 1.000000e+00 : f32
    %5 = vector.broadcast %cst_4 : f32 to vector<2x1024xf32>
    %6 = vector.broadcast %4 : f32 to vector<2x1024xf32>
    %7 = arith.select %3, %5, %6 : vector<2x1024xi1>, vector<2x1024xf32>
    %c0_5 = arith.constant 0 : index
    %c0_6 = arith.constant 0 : index
    %8 = vector.load %arg3[%c0_5, %c0_6] : memref<2x1024xf32, #tpu.memory_space<vmem>>, vector<2x1024xf32>
    tpu.vector_store %arg3[%c0_5, %c0_6], %7 {strides = array<i32>} : memref<2x1024xf32, #tpu.memory_space<vmem>>, vector<2x1024xf32>,
    return
  }
  func.func @transform_0(%arg0: i32) -> (i32, i32) {
    %c0_i32 = arith.constant 0 : i32
    %c0_i32_0 = arith.constant 0 : i32
    %c0_i32_1 = arith.constant 0 : i32
    return %c0_i32, %c0_i32_0 : i32, i32
  }
  func.func @transform_1(%arg0: i32) -> (i32, i32) {
    %c0_i32 = arith.constant 0 : i32
    %c0_i32_0 = arith.constant 0 : i32
    return %arg0, %c0_i32 : i32, i32
  }
  func.func @transform_2(%arg0: i32) -> (i32, i32) {
    %c0_i32 = arith.constant 0 : i32
    %c0_i32_0 = arith.constant 0 : i32
    return %arg0, %c0_i32 : i32, i32
  }
}

</mosaic_0001>

<llo_original>
// kernel: tpu_custom_call.1
$region0: #{tpu_custom_call.1}
  #allocation0 [shape = 'u32[]', space=smem, size = 0x4, offset = 0x4, fixed_abs, tag = 'smem constant byte address 0x4 - core index']
  #allocation1 [shape = 'u32[144,128]{1,0:T(1,128)}', space=vmem, size = 0x12000, scoped, tag = 'internal scratch']
  #allocation2 [shape = 'f32[1,1]{1,0:T(1,128)S(6)}', space=smem, size = 0x200, scoped, tag = 'scoped memory for tpu_custom_call.1']
  %s0 = inlined_call_operand.<no memory space> [shape: f32[1,1], index: 0, kind: input, shape index: {}]
  %s1 = inlined_call_operand.hbm [shape: f32[2,1024], index: 1, kind: input, shape index: {}]
  %s2 = inlined_call_operand.hbm [shape: f32[2,1024], index: 2, kind: output, shape index: {}]
  %s3 = sld [smem:[#allocation0]]
  $region22: #{tpu_custom_call.1} parent=0
    _
  %s5 = ssub.s32 1, %s3
  %s6 = scalar_select 0, %s5, %s3
  %7 = sst [smem:[#allocation2]] %s0
  $region1: #{tpu_custom_call.1} parent=0
    #allocation3 [shape = 'u8[8192]{0}', space=vmem, size = 0x2000, scoped, tag = 'input window, operand 1, single buffered']
    #allocation4 [shape = 's32[1]{0}', space=sflag, size = 0x4, scoped, tag = 'scoped memory for tpu_custom_call.1']
    #allocation5 [shape = 's32[1]{0}', space=sflag, size = 0x4, scoped, tag = 'scoped memory for tpu_custom_call.1']
    #allocation6 [shape = 'u8[8192]{0}', space=vmem, size = 0x2000, scoped, tag = 'output window, operand 0, single buffered']
    %8 = vsyncpa [#allocation4], 0
    %9 = vsyncpa [#allocation5], 0
    // Predicated region
    $region2: #{tpu_custom_call.1} parent=1 // pred_check
      _
    $region3: #{tpu_custom_call.1} parent=1 // pred_check_branch
      %11 = sbr.rel (0) target = $region5
    $region4: #{tpu_custom_call.1} parent=1 // pred_region
      _
    $region5: #{tpu_custom_call.1} parent=1 // pred_fallthru
      _
    // Predicated region
    $region6: #{tpu_custom_call.1} parent=1 // pred_check
      _
    $region7: #{tpu_custom_call.1} parent=1 // pred_check_branch
      %13 = sbr.rel (0) target = $region9
    $region8: #{tpu_custom_call.1} parent=1 // pred_region
      %s15 = ssub.s32 256, 256
      %16 = vsyncadd [#allocation4], %s15
      %s18 = sshll.u32 [#allocation3], 4
      %s19 = int_to_ptr.vmem [resolvable:$true] %s18
      %21 = dma.hbm_to_vmem [thread:$0]  %s1, 256, %s19, [#allocation4]
    $region9: #{tpu_custom_call.1} parent=1 // pred_fallthru
      _
    // Predicated region
    $region10: #{tpu_custom_call.1} parent=1 // pred_check
      _
    $region11: #{tpu_custom_call.1} parent=1 // pred_check_branch
      %23 = sbr.rel (0) target = $region13
    $region12: #{tpu_custom_call.1} parent=1 // pred_region
      %24 = dma.done [#allocation4], 256
    $region13: #{tpu_custom_call.1} parent=1 // pred_fallthru
      _
    %v25 = vld [vmem:[#allocation3] sm:$0xff]
    %v26 = vld [vmem:[#allocation3 + $0x8] sm:$0xff]
    %s27 = sld [smem:[#allocation2]]
    %v28 = vstv %s27
    %vm29 = vcmp.gt.f32.partialorder %v25, %v28
    %vm30 = vcmp.gt.f32.partialorder %v26, %v28
    %v31 = vsel %vm29, 1.0, -1.0
    %v32 = vsel %vm30, 1.0, -1.0
    %33 = vst [vmem:[#allocation6] sm:$0xff] %v31
    %34 = vst [vmem:[#allocation6 + $0x8] sm:$0xff] %v32
    // Predicated region
    $region14: #{tpu_custom_call.1} parent=1 // pred_check
      _
    $region15: #{tpu_custom_call.1} parent=1 // pred_check_branch
      %36 = sbr.rel (0) target = $region17
    $region16: #{tpu_custom_call.1} parent=1 // pred_region
      %s38 = ssub.s32 256, 256
      %39 = vsyncadd [#allocation5], %s38
      %s41 = sshll.u32 [#allocation6], 4
      %s42 = int_to_ptr.vmem [resolvable:$true] %s41
      %44 = dma.vmem_to_hbm [thread:$0]  %s42, 256, %s2, [#allocation5]
    $region17: #{tpu_custom_call.1} parent=1 // pred_fallthru
      _
    // Predicated region
    $region18: #{tpu_custom_call.1} parent=1 // pred_check
      _
    $region19: #{tpu_custom_call.1} parent=1 // pred_check_branch
      %46 = sbr.rel (0) target = $region21
    $region20: #{tpu_custom_call.1} parent=1 // pred_region
      %47 = dma.done [#allocation5], 256
    $region21: #{tpu_custom_call.1} parent=1 // pred_fallthru
      _
    %48 = vsyncpa [#allocation4], 1
    %49 = vsyncpa [#allocation5], 1

</llo_original>
